<compile_context>
chip_gen: v6e
topology: v6e:2x2x1
jax: 0.10.0
libtpu: 0.0.40
codegen_flags: <defaults>
</compile_context>

<pallas_src>
import functools

import jax
import jax.numpy as jnp
from jax.experimental import pallas as pl
from jax.experimental.pallas import tpu as pltpu


def _gate_kernel(x_ref, w01_ref, b01_ref, out_ref, *,
                 top_k, num_experts, inv_hw, neg_slope, hw_chunk):
    # x_ref: (bB, C, HW) — spatial dims folded onto the lane axis.
    HW = x_ref.shape[2]
    n_chunks = HW // hw_chunk
    E = num_experts

    # ---- Fused single-pass global max-pool + avg-pool (x read once) -------
    x0 = x_ref[:, :, pl.ds(0, hw_chunk)].astype(jnp.float32)
    gmp = jnp.max(x0, axis=2)                       # running max  (bB, C)
    gsum = jnp.sum(x0, axis=2)                      # running sum  (bB, C)
    if n_chunks > 1:
        def body(ci, carry):
            mx, sm = carry
            off = pl.multiple_of(ci * hw_chunk, hw_chunk)
            xc = x_ref[:, :, pl.ds(off, hw_chunk)].astype(jnp.float32)
            return (jnp.maximum(mx, jnp.max(xc, axis=2)),
                    sm + jnp.sum(xc, axis=2))
        gmp, gsum = jax.lax.fori_loop(1, n_chunks, body, (gmp, gsum),
                                      unroll=(n_chunks <= 8))
    pooled = gmp + gsum * inv_hw                    # (bB, C)

    # ---- Both tiny linears as one MXU matmul ------------------------------
    # w01 = concat([w0, w1], axis=0).T -> (C, 2E); cols [:E]=fc0, [E:]=fc1.
    w01 = w01_ref[...].astype(jnp.float32)
    b01 = b01_ref[...].astype(jnp.float32)          # (1, 2E)
    z = jnp.dot(pooled, w01, preferred_element_type=jnp.float32) + b01
    z0 = z[:, :E]                                   # fc0 pre-act
    z1 = z[:, E:]                                   # fc1 pre-act

    # LeakyReLU(0.2)
    h = jnp.where(z1 > 0, z1, neg_slope * z1)
    # Softplus (numerically stable; exp/log on the EUP)
    noise = jnp.maximum(z0, 0.0) + jnp.log1p(jnp.exp(-jnp.abs(z0)))

    # Normalize noise: torch.std is unbiased (N-1); std==0 -> 1.
    mean = jnp.sum(noise, axis=1, keepdims=True) * (1.0 / E)
    centered = noise - mean
    var = jnp.sum(centered * centered, axis=1, keepdims=True) * (1.0 / (E - 1))
    std = jnp.sqrt(var)
    safe_std = jnp.where(std == 0.0, 1.0, std)
    norm_noise = centered * (1.0 / safe_std)

    s = h + norm_noise                              # top-k scoring

    # ---- Exact top-k mask (keeps exactly top_k per row, matching
    #      torch.topk + scatter even under ties).  top_k is static.
    neg_big = jnp.float32(jnp.finfo(jnp.float32).min)
    iota = jax.lax.broadcasted_iota(jnp.int32, s.shape, 1)
    work = s
    keep = jnp.zeros(s.shape, dtype=jnp.bool_)
    for _ in range(top_k):
        cur = jnp.max(work, axis=1, keepdims=True)
        is_max = work == cur
        first = jnp.min(jnp.where(is_max, iota, E), axis=1, keepdims=True)
        sel = iota == first
        keep = jnp.logical_or(keep, sel)
        work = jnp.where(sel, neg_big, work)

    masked = jnp.where(keep, h, jnp.float32(-1e9))  # x[~mask] = -1e9

    # Softmax over experts (dim=1)
    m = jnp.max(masked, axis=1, keepdims=True)
    e = jnp.exp(masked - m)
    denom = jnp.sum(e, axis=1, keepdims=True)
    out_ref[...] = (e * (1.0 / denom)).astype(out_ref.dtype)


def _default_block_bytes_budget():
    """Per-x-block byte budget, safe on every TPU generation.

    6 MiB always fits (2x double-buffer = 12 MiB < v5e's 16 MiB scoped default
    even before we raise vmem_limit_bytes).  When the VMEM capacity can be
    queried, bump: 16 MiB on 128 MiB parts (v5e/v6e), 8 MiB on 64 MiB parts
    (v7x, which also wants smaller tiles so both TensorCores get grid steps).
    """
    budget = 6 << 20
    try:
        vmem = getattr(pltpu.get_tpu_info(), "vmem_capacity_bytes", 0)
        if vmem >= (96 << 20):
            budget = 16 << 20
        elif vmem > 0:
            budget = 8 << 20
    except Exception:
        pass
    return budget


def gate_forward(x, w0, b0, w1, b1, top_k, *, block_bytes_budget=None):
    """x: (B, C, H, W); w0/w1: (E, C); b0/b1: (E,). Returns (B, E) gating."""
    B, C, H, W = x.shape
    E = w0.shape[0]
    assert C == w0.shape[1] == w1.shape[1]
    assert E >= 2, "num_experts must be >= 2 (unbiased std over experts)"
    assert 1 <= int(top_k) <= E
    HW = H * W

    # Fold spatial dims onto the lane axis (lane-dense when H*W % 128 == 0).
    x2 = x.reshape(B, C, HW)

    if block_bytes_budget is None:
        block_bytes_budget = _default_block_bytes_budget()

    per_row = C * HW * x2.dtype.itemsize
    budget_rows = max(1, block_bytes_budget // per_row)

    # --- Batch tile selection -----------------------------------------------
    if B <= 8:
        # Full-array block: (B, E) equals full out dims, no 8-alignment needed.
        bB = B
    else:
        bB = min(B, budget_rows)
        if B >= 16:
            # Megacore (v7x: 2 TCs): keep at least 2 grid steps on the
            # "parallel" batch axis when B allows.
            half8 = ((-(-B // 2)) + 7) // 8 * 8
            bB = min(bB, half8)
        bB = max(8, (bB // 8) * 8)      # 8-aligned out-block sublane dim

    # Pad B up to a multiple of bB (never fall back to a pathological bB=B).
    B_pad = -(-B // bB) * bB
    if B_pad != B:
        x2 = jnp.pad(x2, ((0, B_pad - B), (0, 0), (0, 0)))
    grid = (B_pad // bB,)

    # Fused weights for one MXU matmul: (C, 2E); cols [:E]=fc0, [E:]=fc1.
    w01 = jnp.concatenate([w0, w1], axis=0).T
    b01 = jnp.concatenate([b0, b1], axis=0).reshape(1, 2 * E)

    # Lane-axis chunk for the fused single-pass pooling loop.
    hw_chunk = HW
    for cand in (512, 256, 128):
        if HW % cand == 0:
            hw_chunk = cand
            break

    kernel = functools.partial(
        _gate_kernel, top_k=int(top_k), num_experts=E,
        inv_hw=1.0 / HW, neg_slope=0.2, hw_chunk=hw_chunk)

    # Scoped-VMEM limit sized to the double-buffered x block + generous slack
    # for weights/bias/output/compiler scratch; well under v7x's 64 MiB.
    block_bytes = bB * per_row
    vmem_limit = int(min(48 << 20, 2 * block_bytes + (8 << 20)))

    out = pl.pallas_call(
        kernel,
        out_shape=jax.ShapeDtypeStruct((B_pad, E), jnp.float32),
        grid=grid,
        in_specs=[
            pl.BlockSpec((bB, C, HW), lambda i: (i, 0, 0)),   # x, tiled over batch
            pl.BlockSpec((C, 2 * E), lambda i: (0, 0)),       # fused weights (const)
            pl.BlockSpec((1, 2 * E), lambda i: (0, 0)),       # fused bias    (const)
        ],
        out_specs=pl.BlockSpec((bB, E), lambda i: (i, 0)),
        compiler_params=pltpu.CompilerParams(
            dimension_semantics=("parallel",),
            vmem_limit_bytes=vmem_limit,
        ),
    )(x2, w01, b01)
    return out[:B] if B_pad != B else out


class GateNetwork:
    """JAX/Pallas port of the PyTorch GateNetwork module."""

    def __init__(self, input_size, num_experts, top_k, key=None):
        self.input_size = input_size
        self.num_experts = num_experts
        self.top_k = top_k
        if key is None:
            key = jax.random.PRNGKey(0)
        k0w, k0b, k1b = jax.random.split(key, 3)
        bound = 1.0 / (input_size ** 0.5)
        # fc0: default PyTorch Linear init range
        self.w0 = jax.random.uniform(k0w, (num_experts, input_size),
                                     jnp.float32, -bound, bound)
        self.b0 = jax.random.uniform(k0b, (num_experts,), jnp.float32,
                                     -bound, bound)
        # fc1: weight zero-initialized (init.zeros_), bias default init
        self.w1 = jnp.zeros((num_experts, input_size), jnp.float32)
        self.b1 = jax.random.uniform(k1b, (num_experts,), jnp.float32,
                                     -bound, bound)

    def __call__(self, x):
        return gate_forward(x, self.w0, self.b0, self.w1, self.b1, self.top_k)


# ---- Pure-JAX reference (mirrors the torch code) ---------------------------
def _ref_forward(x, w0, b0, w1, b1, top_k):
    gmp = jnp.max(x, axis=(2, 3))
    gap = jnp.mean(x, axis=(2, 3))
    pooled = gmp + gap
    z1 = pooled @ w1.T + b1
    h = jnp.where(z1 > 0, z1, 0.2 * z1)
    z0 = pooled @ w0.T + b0
    noise = jax.nn.softplus(z0)
    noise_mean = jnp.mean(noise, axis=1, keepdims=True)
    std = jnp.std(noise, axis=1, keepdims=True, ddof=1)
    std = jnp.where(std == 0.0, 1.0, std)
    norm_noise = (noise - noise_mean) / std
    s = h + norm_noise
    thresh = jax.lax.top_k(s, top_k)[0][:, -1:]
    mask = s >= thresh
    masked = jnp.where(mask, h, -1e9)
    return jax.nn.softmax(masked, axis=1)


if __name__ == "__main__":
    # ---- Test 1: module-sized shapes, fc1 zero-init (as in the torch module)
    B, C, H, W = 2, 32, 16, 16
    num_experts, top_k = 8, 2

    key = jax.random.PRNGKey(0)
    kx, kp, kw0, kb0, kw1, kb1, kx2 = jax.random.split(key, 7)
    x = jax.random.normal(kx, (B, C, H, W), dtype=jnp.float32)

    gate = GateNetwork(C, num_experts, top_k, key=kp)
    out = jax.block_until_ready(gate(x))
    ref = _ref_forward(x, gate.w0, gate.b0, gate.w1, gate.b1, top_k)
    assert out.shape == (B, num_experts)
    assert jnp.allclose(out, ref, atol=1e-5, rtol=1e-5)
    assert jnp.allclose(jnp.sum(out, axis=1), 1.0, atol=1e-5)

    # ---- Test 2: non-zero fc1, awkward batch (padding path), larger spatial
    # (exercises the chunked single-pass pooling loop and the multi-step grid).
    B2, C2, H2, W2, k2 = 18, 32, 32, 32, 3
    x2 = jax.random.normal(kx2, (B2, C2, H2, W2), dtype=jnp.float32)
    w0 = jax.random.normal(kw0, (num_experts, C2), jnp.float32) * 0.1
    b0 = jax.random.normal(kb0, (num_experts,), jnp.float32) * 0.1
    w1 = jax.random.normal(kw1, (num_experts, C2), jnp.float32) * 0.1
    b1 = jax.random.normal(kb1, (num_experts,), jnp.float32) * 0.1

    out2 = jax.block_until_ready(gate_forward(x2, w0, b0, w1, b1, k2))
    ref2 = _ref_forward(x2, w0, b0, w1, b1, k2)
    assert out2.shape == (B2, num_experts)
    assert jnp.allclose(out2, ref2, atol=1e-5, rtol=1e-5)
    assert jnp.allclose(jnp.sum(out2, axis=1), 1.0, atol=1e-5)

    print("KERNEL_OK")
</pallas_src>

<mosaic_0001>
module attributes {stable_mosaic.version = 11 : i64} {
  func.func @_gate_kernel(%arg0: i32, %arg1: memref<2x32x256xf32, #tpu.memory_space<vmem>>, %arg2: memref<32x16xf32, #tpu.memory_space<vmem>>, %arg3: memref<1x16xf32, #tpu.memory_space<vmem>>, %arg4: memref<2x8xf32, #tpu.memory_space<vmem>>) attributes {dimension_semantics = [#tpu.dimension_semantics<parallel>], iteration_bounds = array<i64: 1>, scalar_prefetch = 0 : i64, scratch_operands = 0 : i64, tpu.core_type = #tpu.core_type<tc>, window_params = [{transform_indices = @transform_0, window_bounds = array<i64: 2, 32, 256>}, {pipeline_mode = #tpu.pipeline_mode<synchronous>, transform_indices = @transform_1, window_bounds = array<i64: 32, 16>}, {pipeline_mode = #tpu.pipeline_mode<synchronous>, transform_indices = @transform_2, window_bounds = array<i64: 1, 16>}, {transform_indices = @transform_3, window_bounds = array<i64: 2, 8>}]} {
    %c0 = arith.constant 0 : index
    %c0_0 = arith.constant 0 : index
    %c0_1 = arith.constant 0 : index
    %0 = vector.load %arg1[%c0, %c0_0, %c0_1] : memref<2x32x256xf32, #tpu.memory_space<vmem>>, vector<2x32x256xf32>
    %cst = arith.constant dense<0xFF800000> : vector<2x32xf32>
    %1 = vector.multi_reduction <maximumf>, %0, %cst [2] : vector<2x32x256xf32> to vector<2x32xf32>
    %cst_2 = arith.constant dense<0.000000e+00> : vector<2x32xf32>
    %2 = vector.multi_reduction <add>, %0, %cst_2 [2] : vector<2x32x256xf32> to vector<2x32xf32>
    %cst_3 = arith.constant 3.906250e-03 : f32
    %3 = vector.broadcast %cst_3 : f32 to vector<2x32xf32>
    %4 = arith.mulf %2, %3 : vector<2x32xf32>
    %5 = arith.addf %1, %4 : vector<2x32xf32>
    %c0_4 = arith.constant 0 : index
    %c0_5 = arith.constant 0 : index
    %6 = vector.load %arg2[%c0_4, %c0_5] : memref<32x16xf32, #tpu.memory_space<vmem>>, vector<32x16xf32>
    %c0_6 = arith.constant 0 : index
    %c0_7 = arith.constant 0 : index
    %7 = vector.load %arg3[%c0_6, %c0_7] : memref<1x16xf32, #tpu.memory_space<vmem>>, vector<1x16xf32>
    %cst_8 = arith.constant dense<0.000000e+00> : vector<2x16xf32>
    %8 = tpu.matmul %5, %6, %cst_8 {dimension_numbers = #tpu.dot_dimension_numbers<[1], [0], [0], [1], [0, 0, 1, 1], [], []>} : vector<2x32xf32>, vector<32x16xf32>, vector<2x16xf32> -> vector<2x16xf32>
    %9 = vector.broadcast %7 : vector<1x16xf32> to vector<2x16xf32>
    %10 = arith.addf %8, %9 : vector<2x16xf32>
    %11 = vector.extract_strided_slice %10 {offsets = [0, 0], sizes = [2, 8], strides = [1, 1]} : vector<2x16xf32> to vector<2x8xf32>
    %12 = vector.extract_strided_slice %10 {offsets = [0, 8], sizes = [2, 8], strides = [1, 1]} : vector<2x16xf32> to vector<2x8xf32>
    %cst_9 = arith.constant 0.000000e+00 : f32
    %13 = vector.broadcast %cst_9 : f32 to vector<2x8xf32>
    %14 = arith.cmpf ogt, %12, %13 : vector<2x8xf32>
    %cst_10 = arith.constant 2.000000e-01 : f32
    %15 = vector.broadcast %cst_10 : f32 to vector<2x8xf32>
    %16 = arith.mulf %15, %12 : vector<2x8xf32>
    %17 = arith.select %14, %12, %16 : vector<2x8xi1>, vector<2x8xf32>
    %cst_11 = arith.constant 0.000000e+00 : f32
    %18 = vector.broadcast %cst_11 : f32 to vector<2x8xf32>
    %19 = arith.maximumf %11, %18 : vector<2x8xf32>
    %20 = math.absf %11 : vector<2x8xf32>
    %cst_12 = arith.constant 0.000000e+00 : f32
    %21 = vector.broadcast %cst_12 : f32 to vector<2x8xf32>
    %22 = arith.subf %21, %20 : vector<2x8xf32>
    %23 = math.exp %22 : vector<2x8xf32>
    %24 = math.log1p %23 : vector<2x8xf32>
    %25 = arith.addf %19, %24 : vector<2x8xf32>
    %cst_13 = arith.constant dense<0.000000e+00> : vector<2xf32>
    %26 = vector.multi_reduction <add>, %25, %cst_13 [1] : vector<2x8xf32> to vector<2xf32>
    %27 = vector.shape_cast %26 : vector<2xf32> to vector<2x1xf32>
    %cst_14 = arith.constant 1.250000e-01 : f32
    %28 = vector.broadcast %cst_14 : f32 to vector<2x1xf32>
    %29 = arith.mulf %27, %28 : vector<2x1xf32>
    %30 = vector.broadcast %29 : vector<2x1xf32> to vector<2x8xf32>
    %31 = arith.subf %25, %30 : vector<2x8xf32>
    %32 = arith.mulf %31, %31 : vector<2x8xf32>
    %cst_15 = arith.constant dense<0.000000e+00> : vector<2xf32>
    %33 = vector.multi_reduction <add>, %32, %cst_15 [1] : vector<2x8xf32> to vector<2xf32>
    %34 = vector.shape_cast %33 : vector<2xf32> to vector<2x1xf32>
    %cst_16 = arith.constant 0.142857149 : f32
    %35 = vector.broadcast %cst_16 : f32 to vector<2x1xf32>
    %36 = arith.mulf %34, %35 : vector<2x1xf32>
    %37 = math.sqrt %36 : vector<2x1xf32>
    %cst_17 = arith.constant 0.000000e+00 : f32
    %38 = vector.broadcast %cst_17 : f32 to vector<2x1xf32>
    %39 = arith.cmpf oeq, %37, %38 : vector<2x1xf32>
    %cst_18 = arith.constant 1.000000e+00 : f32
    %40 = vector.broadcast %cst_18 : f32 to vector<2x1xf32>
    %41 = arith.select %39, %40, %37 : vector<2x1xi1>, vector<2x1xf32>
    %cst_19 = arith.constant 1.000000e+00 : f32
    %42 = vector.broadcast %cst_19 : f32 to vector<2x1xf32>
    %43 = arith.divf %42, %41 : vector<2x1xf32>
    %44 = vector.broadcast %43 : vector<2x1xf32> to vector<2x8xf32>
    %45 = arith.mulf %31, %44 : vector<2x8xf32>
    %46 = arith.addf %17, %45 : vector<2x8xf32>
    %47 = tpu.iota {dimensions = array<i32: 1>} : vector<2x8xi32>
    %false = arith.constant false
    %48 = vector.broadcast %false : i1 to vector<2x8xi1>
    %cst_20 = arith.constant dense<0xFF800000> : vector<2xf32>
    %49 = vector.multi_reduction <maximumf>, %46, %cst_20 [1] : vector<2x8xf32> to vector<2xf32>
    %50 = vector.shape_cast %49 : vector<2xf32> to vector<2x1xf32>
    %51 = vector.broadcast %50 : vector<2x1xf32> to vector<2x8xf32>
    %52 = arith.cmpf oeq, %46, %51 : vector<2x8xf32>
    %c8_i32 = arith.constant 8 : i32
    %53 = vector.broadcast %c8_i32 : i32 to vector<2x8xi32>
    %54 = arith.select %52, %47, %53 : vector<2x8xi1>, vector<2x8xi32>
    %cst_21 = arith.constant dense<2147483647> : vector<2xi32>
    %55 = vector.multi_reduction <minsi>, %54, %cst_21 [1] : vector<2x8xi32> to vector<2xi32>
    %56 = vector.shape_cast %55 : vector<2xi32> to vector<2x1xi32>
    %57 = vector.broadcast %56 : vector<2x1xi32> to vector<2x8xi32>
    %58 = arith.cmpi eq, %47, %57 : vector<2x8xi32>
    %59 = arith.ori %48, %58 : vector<2x8xi1>
    %cst_22 = arith.constant -3.40282347E+38 : f32
    %60 = vector.broadcast %cst_22 : f32 to vector<2x8xf32>
    %61 = arith.select %58, %60, %46 : vector<2x8xi1>, vector<2x8xf32>
    %cst_23 = arith.constant dense<0xFF800000> : vector<2xf32>
    %62 = vector.multi_reduction <maximumf>, %61, %cst_23 [1] : vector<2x8xf32> to vector<2xf32>
    %63 = vector.shape_cast %62 : vector<2xf32> to vector<2x1xf32>
    %64 = vector.broadcast %63 : vector<2x1xf32> to vector<2x8xf32>
    %65 = arith.cmpf oeq, %61, %64 : vector<2x8xf32>
    %c8_i32_24 = arith.constant 8 : i32
    %66 = vector.broadcast %c8_i32_24 : i32 to vector<2x8xi32>
    %67 = arith.select %65, %47, %66 : vector<2x8xi1>, vector<2x8xi32>
    %cst_25 = arith.constant dense<2147483647> : vector<2xi32>
    %68 = vector.multi_reduction <minsi>, %67, %cst_25 [1] : vector<2x8xi32> to vector<2xi32>
    %69 = vector.shape_cast %68 : vector<2xi32> to vector<2x1xi32>
    %70 = vector.broadcast %69 : vector<2x1xi32> to vector<2x8xi32>
    %71 = arith.cmpi eq, %47, %70 : vector<2x8xi32>
    %72 = arith.ori %59, %71 : vector<2x8xi1>
    %cst_26 = arith.constant -1.000000e+09 : f32
    %73 = vector.broadcast %cst_26 : f32 to vector<2x8xf32>
    %74 = arith.select %72, %17, %73 : vector<2x8xi1>, vector<2x8xf32>
    %cst_27 = arith.constant dense<0xFF800000> : vector<2xf32>
    %75 = vector.multi_reduction <maximumf>, %74, %cst_27 [1] : vector<2x8xf32> to vector<2xf32>
    %76 = vector.shape_cast %75 : vector<2xf32> to vector<2x1xf32>
    %77 = vector.broadcast %76 : vector<2x1xf32> to vector<2x8xf32>
    %78 = arith.subf %74, %77 : vector<2x8xf32>
    %79 = math.exp %78 : vector<2x8xf32>
    %cst_28 = arith.constant dense<0.000000e+00> : vector<2xf32>
    %80 = vector.multi_reduction <add>, %79, %cst_28 [1] : vector<2x8xf32> to vector<2xf32>
    %81 = vector.shape_cast %80 : vector<2xf32> to vector<2x1xf32>
    %cst_29 = arith.constant 1.000000e+00 : f32
    %82 = vector.broadcast %cst_29 : f32 to vector<2x1xf32>
    %83 = arith.divf %82, %81 : vector<2x1xf32>
    %84 = vector.broadcast %83 : vector<2x1xf32> to vector<2x8xf32>
    %85 = arith.mulf %79, %84 : vector<2x8xf32>
    %c0_30 = arith.constant 0 : index
    %c0_31 = arith.constant 0 : index
    %86 = vector.load %arg4[%c0_30, %c0_31] : memref<2x8xf32, #tpu.memory_space<vmem>>, vector<2x8xf32>
    tpu.vector_store %arg4[%c0_30, %c0_31], %85 {strides = array<i32>} : memref<2x8xf32, #tpu.memory_space<vmem>>, vector<2x8xf32>,
    return
  }
  func.func @transform_0(%arg0: i32) -> (i32, i32, i32) {
    %c0_i32 = arith.constant 0 : i32
    %c0_i32_0 = arith.constant 0 : i32
    %c0_i32_1 = arith.constant 0 : i32
    return %arg0, %c0_i32, %c0_i32_0 : i32, i32, i32
  }
  func.func @transform_1(%arg0: i32) -> (i32, i32) {
    %c0_i32 = arith.constant 0 : i32
    %c0_i32_0 = arith.constant 0 : i32
    %c0_i32_1 = arith.constant 0 : i32
    return %c0_i32, %c0_i32_0 : i32, i32
  }
  func.func @transform_2(%arg0: i32) -> (i32, i32) {
    %c0_i32 = arith.constant 0 : i32
    %c0_i32_0 = arith.constant 0 : i32
    %c0_i32_1 = arith.constant 0 : i32
    return %c0_i32, %c0_i32_0 : i32, i32
  }
  func.func @transform_3(%arg0: i32) -> (i32, i32) {
    %c0_i32 = arith.constant 0 : i32
    %c0_i32_0 = arith.constant 0 : i32
    return %arg0, %c0_i32 : i32, i32
  }
}

</mosaic_0001>

<llo_original>
// kernel: tpu_custom_call.1
$region0: #{tpu_custom_call.1}
  #allocation0 [shape = 'u32[]', space=smem, size = 0x4, offset = 0x4, fixed_abs, tag = 'smem constant byte address 0x4 - core index']
  #allocation1 [shape = 'u32[144,128]{1,0:T(1,128)}', space=vmem, size = 0x12000, scoped, tag = 'internal scratch']
  %s0 = inlined_call_operand.hbm [shape: f32[2,32,256], index: 0, kind: input, shape index: {}]
  %s1 = inlined_call_operand.vmem [shape: f32[32,16], index: 1, kind: input, shape index: {}]
  %s2 = inlined_call_operand.vmem [shape: f32[1,16], index: 2, kind: input, shape index: {}]
  %s3 = inlined_call_operand.hbm [shape: f32[2,8], index: 3, kind: output, shape index: {}]
  %s4 = sld [smem:[#allocation0]]
  $region26: #{tpu_custom_call.1} parent=0
    _
  %s6 = ssub.s32 1, %s4
  %s7 = scalar_select 0, %s6, %s4
  $region1: #{tpu_custom_call.1} parent=0
    #allocation2 [shape = 'u8[65536]{0}', space=vmem, size = 0x10000, scoped, tag = 'input window, operand 0, single buffered']
    #allocation3 [shape = 's32[1]{0}', space=sflag, size = 0x4, scoped, tag = 'scoped memory for tpu_custom_call.1']
    #allocation4 [shape = 's32[1]{0}', space=sflag, size = 0x4, scoped, tag = 'scoped memory for tpu_custom_call.1']
    #allocation5 [shape = 'u8[1024]{0}', space=vmem, size = 0x400, scoped, tag = 'output window, operand 0, single buffered']
    %8 = vsyncpa [#allocation3], 0
    %9 = vsyncpa [#allocation4], 0
    // Predicated region
    $region2: #{tpu_custom_call.1} parent=1 // pred_check
      _
    $region3: #{tpu_custom_call.1} parent=1 // pred_check_branch
      %11 = sbr.rel (0) target = $region5
    $region4: #{tpu_custom_call.1} parent=1 // pred_region
      %s13 = ssub.s32 2048, 2048
      %14 = vsyncadd [#allocation3], %s13
      %s15 = sshll.u32 [#allocation2], 4
      %s16 = int_to_ptr.vmem [resolvable:$true] %s15
      %21 = dma.hbm_to_vmem [thread:$0]  %s0, 2048, %s16, [#allocation3], 256, 256, 16
    $region5: #{tpu_custom_call.1} parent=1 // pred_fallthru
      _
    // Predicated region
    $region6: #{tpu_custom_call.1} parent=1 // pred_check
      _
    $region7: #{tpu_custom_call.1} parent=1 // pred_check_branch
      %23 = sbr.rel (0) target = $region9
    $region8: #{tpu_custom_call.1} parent=1 // pred_region
      _
    $region9: #{tpu_custom_call.1} parent=1 // pred_fallthru
      _
    // Predicated region
    $region10: #{tpu_custom_call.1} parent=1 // pred_check
      _
    $region11: #{tpu_custom_call.1} parent=1 // pred_check_branch
      %25 = sbr.rel (0) target = $region13
    $region12: #{tpu_custom_call.1} parent=1 // pred_region
      _
    $region13: #{tpu_custom_call.1} parent=1 // pred_fallthru
      _
    // Predicated region
    $region14: #{tpu_custom_call.1} parent=1 // pred_check
      _
    $region15: #{tpu_custom_call.1} parent=1 // pred_check_branch
      %27 = sbr.rel (0) target = $region17
    $region16: #{tpu_custom_call.1} parent=1 // pred_region
      %28 = dma.done [#allocation3], 2048
    $region17: #{tpu_custom_call.1} parent=1 // pred_fallthru
      _
    %v29 = vld [vmem:[#allocation2] sm:$0xff]
    %v30 = vld [vmem:[#allocation2 + $0x8] sm:$0xff]
    %v31 = vld [vmem:[#allocation2 + $0x10] sm:$0xff]
    %v32 = vld [vmem:[#allocation2 + $0x18] sm:$0xff]
    %v33 = vld [vmem:[#allocation2 + $0x20] sm:$0xff]
    %v34 = vld [vmem:[#allocation2 + $0x28] sm:$0xff]
    %v35 = vld [vmem:[#allocation2 + $0x30] sm:$0xff]
    %v36 = vld [vmem:[#allocation2 + $0x38] sm:$0xff]
    %v37 = vld [vmem:[#allocation2 + $0x40] sm:$0xff]
    %v38 = vld [vmem:[#allocation2 + $0x48] sm:$0xff]
    %v39 = vld [vmem:[#allocation2 + $0x50] sm:$0xff]
    %v40 = vld [vmem:[#allocation2 + $0x58] sm:$0xff]
    %v41 = vld [vmem:[#allocation2 + $0x60] sm:$0xff]
    %v42 = vld [vmem:[#allocation2 + $0x68] sm:$0xff]
    %v43 = vld [vmem:[#allocation2 + $0x70] sm:$0xff]
    %v44 = vld [vmem:[#allocation2 + $0x78] sm:$0xff]
    %v45 = vmax.f32 %v29, %v30
    %46 = vmax.xlane.f32.xlu0 %v45
    %v47 = vpop.xlane.xlu0 %46
    %v48 = vmax.f32 %v31, %v32
    %49 = vmax.xlane.f32.xlu0 %v48
    %v50 = vpop.xlane.xlu0 %49
    %v51 = vmax.f32 %v33, %v34
    %52 = vmax.xlane.f32.xlu0 %v51
    %v53 = vpop.xlane.xlu0 %52
    %v54 = vmax.f32 %v35, %v36
    %55 = vmax.xlane.f32.xlu0 %v54
    %v56 = vpop.xlane.xlu0 %55
    %v57 = vmax.f32 %v37, %v38
    %58 = vmax.xlane.f32.xlu0 %v57
    %v59 = vpop.xlane.xlu0 %58
    %v60 = vmax.f32 %v39, %v40
    %61 = vmax.xlane.f32.xlu0 %v60
    %v62 = vpop.xlane.xlu0 %61
    %v63 = vmax.f32 %v41, %v42
    %64 = vmax.xlane.f32.xlu0 %v63
    %v65 = vpop.xlane.xlu0 %64
    %v66 = vmax.f32 %v43, %v44
    %67 = vmax.xlane.f32.xlu0 %v66
    %v68 = vpop.xlane.xlu0 %67
    %v69 = vadd.f32 %v29, %v30
    %70 = vadd.xlane.f32.xlu0 %v69
    %v71 = vpop.xlane.xlu0 %70
    %v72 = vadd.f32 %v31, %v32
    %73 = vadd.xlane.f32.xlu0 %v72
    %v74 = vpop.xlane.xlu0 %73
    %v75 = vadd.f32 %v33, %v34
    %76 = vadd.xlane.f32.xlu0 %v75
    %v77 = vpop.xlane.xlu0 %76
    %v78 = vadd.f32 %v35, %v36
    %79 = vadd.xlane.f32.xlu0 %v78
    %v80 = vpop.xlane.xlu0 %79
    %v81 = vadd.f32 %v37, %v38
    %82 = vadd.xlane.f32.xlu0 %v81
    %v83 = vpop.xlane.xlu0 %82
    %v84 = vadd.f32 %v39, %v40
    %85 = vadd.xlane.f32.xlu0 %v84
    %v86 = vpop.xlane.xlu0 %85
    %v87 = vadd.f32 %v41, %v42
    %88 = vadd.xlane.f32.xlu0 %v87
    %v89 = vpop.xlane.xlu0 %88
    %v90 = vadd.f32 %v43, %v44
    %91 = vadd.xlane.f32.xlu0 %v90
    %v92 = vpop.xlane.xlu0 %91
    %v93 = vmul.f32 %v71, 0.00390625
    %v94 = vmul.f32 %v74, 0.00390625
    %v95 = vmul.f32 %v77, 0.00390625
    %v96 = vmul.f32 %v80, 0.00390625
    %v97 = vmul.f32 %v83, 0.00390625
    %v98 = vmul.f32 %v86, 0.00390625
    %v99 = vmul.f32 %v89, 0.00390625
    %v100 = vmul.f32 %v92, 0.00390625
    %v101 = vadd.f32 %v47, %v93
    %v102 = vadd.f32 %v50, %v94
    %v103 = vadd.f32 %v53, %v95
    %v104 = vadd.f32 %v56, %v96
    %v105 = vadd.f32 %v59, %v97
    %v106 = vadd.f32 %v62, %v98
    %v107 = vadd.f32 %v65, %v99
    %v108 = vadd.f32 %v68, %v100
    %v109 = vld [vmem:[%s1] sm:$0xff]
    %v110 = vld [vmem:[%s1 + $0x8] sm:$0xff]
    %v111 = vld [vmem:[%s1 + $0x10] sm:$0xff]
    %v112 = vld [vmem:[%s1 + $0x18] sm:$0xff]
    %v113 = vld [vmem:[%s2] sm:$0x1]
    %v115 = vlaneseq
    %v116 = vshrl.u32 %v115, 7
    %v117 = vsub.s32 0, %v116
    %v118 = vrot.slane %v113, %v117
    %v128 = vlaneseq
    %v129 = vand.u32 %v128, 127
    %v130 = vlaneseq
    %v131 = vshrl.u32 %v130, 7
    %v132 = vsub.s32 %v129, %v131
    %v133 = vrot.slane %v101, %v132
    %v134 = vadd.s32 %v129, 4294967288
    %v135 = vlaneseq
    %v136 = vshrl.u32 %v135, 7
    %v137 = vsub.s32 %v134, %v136
    %v138 = vrot.slane %v102, %v137
    %vm139 = vcmask 130112
    %v140 = vsel %vm139, %v138, %v133
    %v141 = vadd.s32 %v129, 4294967280
    %v142 = vlaneseq
    %v143 = vshrl.u32 %v142, 7
    %v144 = vsub.s32 %v141, %v143
    %v145 = vrot.slane %v103, %v144
    %vm146 = vcmask 195712
    %v147 = vsel %vm146, %v145, %v140
    %v148 = vadd.s32 %v129, 4294967272
    %v149 = vlaneseq
    %v150 = vshrl.u32 %v149, 7
    %v151 = vsub.s32 %v148, %v150
    %v152 = vrot.slane %v104, %v151
    %vm153 = vcmask 261312
    %v154 = vsel %vm153, %v152, %v147
    %v155 = vlaneseq
    %v156 = vshrl.u32 %v155, 7
    %v157 = vsub.s32 %v129, %v156
    %v158 = vrot.slane %v105, %v157
    %v159 = vlaneseq
    %v160 = vshrl.u32 %v159, 7
    %v161 = vsub.s32 %v134, %v160
    %v162 = vrot.slane %v106, %v161
    %v163 = vsel %vm139, %v162, %v158
    %v164 = vlaneseq
    %v165 = vshrl.u32 %v164, 7
    %v166 = vsub.s32 %v141, %v165
    %v167 = vrot.slane %v107, %v166
    %v168 = vsel %vm146, %v167, %v163
    %v169 = vlaneseq
    %v170 = vshrl.u32 %v169, 7
    %v171 = vsub.s32 %v148, %v170
    %v172 = vrot.slane %v108, %v171
    %v173 = vsel %vm153, %v172, %v168
    %vm174 = vcmask 1041409
    %v175 = vsel %vm174, %v173, %v154
    %vm176 = vcmask 261120
    %v177 = vsel %vm176, %v175, 0
    %179 = vmatprep.subr.mxu0 0.0
    %180 = vmatpush1.msra.mxu0 0.0
    %181 = vmatprep.subr.mxu0 0.0
    %182 = vmatpush1.msra.mxu0 0.0
    %183 = vmatprep.subr.mxu0 0.0
    %184 = vmatpush1.msra.mxu0 0.0
    %185 = vmatprep.subr.mxu0 0.0
    %186 = vmatpush1.msra.mxu0 0.0
    %187 = vmatprep.subr.mxu0 0.0
    %188 = vmatpush1.msra.mxu0 0.0
    %189 = vmatprep.subr.mxu0 0.0
    %190 = vmatpush1.msra.mxu0 0.0
    %191 = vmatprep.subr.mxu0 0.0
    %192 = vmatpush1.msra.mxu0 0.0
    %193 = vmatprep.subr.mxu0 0.0
    %194 = vmatpush1.msra.mxu0 0.0
    %195 = vmatprep.subr.mxu0 0.0
    %196 = vmatpush1.msra.mxu0 0.0
    %197 = vmatprep.subr.mxu0 0.0
    %198 = vmatpush1.msra.mxu0 0.0
    %199 = vmatprep.subr.mxu0 0.0
    %200 = vmatpush1.msra.mxu0 0.0
    %201 = vmatprep.subr.mxu0 0.0
    %202 = vmatpush1.msra.mxu0 0.0
    %203 = vmatprep.subr.mxu0 0.0
    %204 = vmatpush1.msra.mxu0 %v112
    %205 = vmatprep.subr.mxu0 0.0
    %206 = vmatpush1.msra.mxu0 %v111
    %207 = vmatprep.subr.mxu0 0.0
    %208 = vmatpush1.msra.mxu0 %v110
    %209 = vmatprep.subr.mxu0 0.0
    %210 = vmatpush1.msra.mxu0 %v109
    %211 = vmatprep.subr.mxu0 0.0
    %212 = vmatpush2.msra.mxu0 0.0
    %213 = vmatprep.subr.mxu0 0.0
    %214 = vmatpush2.msra.mxu0 0.0
    %215 = vmatprep.subr.mxu0 0.0
    %216 = vmatpush2.msra.mxu0 0.0
    %217 = vmatprep.subr.mxu0 0.0
    %218 = vmatpush2.msra.mxu0 0.0
    %219 = vmatprep.subr.mxu0 0.0
    %220 = vmatpush2.msra.mxu0 0.0
    %221 = vmatprep.subr.mxu0 0.0
    %222 = vmatpush2.msra.mxu0 0.0
    %223 = vmatprep.subr.mxu0 0.0
    %224 = vmatpush2.msra.mxu0 0.0
    %225 = vmatprep.subr.mxu0 0.0
    %226 = vmatpush2.msra.mxu0 0.0
    %227 = vmatprep.subr.mxu0 0.0
    %228 = vmatpush2.msra.mxu0 0.0
    %229 = vmatprep.subr.mxu0 0.0
    %230 = vmatpush2.msra.mxu0 0.0
    %231 = vmatprep.subr.mxu0 0.0
    %232 = vmatpush2.msra.mxu0 0.0
    %233 = vmatprep.subr.mxu0 0.0
    %234 = vmatpush2.msra.mxu0 0.0
    %235 = vmatprep.subr.mxu0 0.0
    %236 = vmatpush2.msra.mxu0 0.0
    %237 = vmatprep.subr.mxu0 0.0
    %238 = vmatpush2.msra.mxu0 0.0
    %239 = vmatprep.subr.mxu0 0.0
    %240 = vmatpush2.msra.mxu0 0.0
    %241 = vmatprep.subr.mxu0 0.0
    %242 = vmatpush2.msra.mxu0 0.0
    %243 = vmatprep.mubr.f32.mxu0 0.0
    %244 = vmatmul.mubr.f32.gmra.mxu0 %v177
    %v245 = vpop.f32.mrf.mxu0
    %v246 = vadd.f32 %v118, %v245
    %v247 = vpop.f32.mrf.mxu0
    %248 = vdwg.mxu0
    %vm249 = vcmp.gt.f32.partialorder %v246, 0.0
    %v250 = vmul.f32 %v246, 0.2
    %v251 = vsel %vm249, %v246, %v250
    %v252 = vmax.f32 %v246, 0.0
    %v253 = vand.u32 2147483647, %v246
    %v254 = vsub.f32 0.0, %v253
    %v255 = vmul.f32 %v254, 1.442695
    %v256 = vpow.pop %v255
    %v257 = vadd.f32 %v256, 1.0
    %v258 = vlog2.pop %v257
    %v259 = vmul.f32 %v258, 0.6931472
    %v260 = vmul.f32 -0.5, %v256
    %v261 = vadd.f32 %v260, 1.0
    %v262 = vmul.f32 %v261, %v256
    %v263 = vand.u32 2147483647, %v256
    %vm264 = vcmp.lt.f32.partialorder %v263, 0.0004427343
    %v265 = vsel %vm264, %v262, %v259
    %v266 = vadd.f32 %v252, %v265
    %vm267 = vcmask 58368
    %v268 = vsel %vm267, %v266, 0.0
    %269 = vadd.xlane.f32.xlu0 %v268
    %v270 = vpop.xlane.xlu0 %269
    %v271 = vmul.f32 %v270, 0.125
    %v272 = vsub.f32 %v266, %v271
    %v273 = vmul.f32 %v272, %v272
    %v274 = vsel %vm267, %v273, 0.0
    %275 = vadd.xlane.f32.xlu0 %v274
    %v276 = vpop.xlane.xlu0 %275
    %v277 = vmul.f32 %v276, 0.14285715
    %v278 = vrsqrt.pop %v277
    %v279 = vmul.f32 %v277, %v278
    %vm280 = vcmp.eq.f32.partialorder %v277, inf
    %v281 = vsel %vm280, %v277, %v279
    %vm282 = vcmp.eq.f32.partialorder %v277, 0.0
    %v283 = vand.u32 %v277, 2147483648
    %v284 = vsel %vm282, %v283, %v281
    %vm285 = vcmp.eq.f32.partialorder %v284, 0.0
    %v286 = vsel %vm285, 1.0, %v284
    %v287 = vrcp.pop %v286
    %v288 = vmul.f32 1.0, %v287
    %v289 = vmul.f32 %v272, %v288
    %291 = vrot.lane.b32.xlu0 %v289, 8
    %v292 = vpop.permute.xlu0 %291
    %v294 = vadd.f32 %v251, %v292
    %vm295 = vcmask 123968
    %v296 = vsel %vm295, %v294, -inf
    %297 = vmax.xlane.f32.xlu0 %v296
    %v298 = vpop.xlane.xlu0 %297
    %vm299 = vcmp.eq.f32.partialorder %v294, %v298
    %300 = vrot.lane.b32.xlu0 %v129, 8
    %v301 = vpop.permute.xlu0 %300
    %v302 = vsel %vm299, %v301, 8
    %v303 = vsel %vm295, %v302, 2147483647
    %v304 = vand.u32 %v303, 65535
    %v305 = vshra.s32 %v303, 16
    %v306 = vcvt.s32.f32 %v304
    %v307 = vcvt.s32.f32 %v305
    %308 = vmin.xlane.f32.xlu0 %v307
    %v309 = vpop.xlane.xlu0 %308
    %vm310 = vcmp.eq.f32.partialorder %v307, %v309
    %v311 = vsel %vm310, %v306, inf
    %312 = vmin.xlane.f32.xlu0 %v311
    %v313 = vpop.xlane.xlu0 %312
    %v314 = vcvt.f32.s32 %v313
    %v315 = vcvt.f32.s32 %v309
    %v316 = vshll.u32 %v315, 16
    %v317 = vadd.s32 %v316, %v314
    %vm318 = vcmp.eq.s32.totalorder %v129, %v317
    %320 = vrot.lane.b32.xlu0 %v294, 120
    %v321 = vpop.permute.xlu0 %320
    %v323 = vsel %vm318, -3.4028235e+38, %v321
    %v324 = vsel %vm267, %v323, -inf
    %325 = vmax.xlane.f32.xlu0 %v324
    %v326 = vpop.xlane.xlu0 %325
    %vm327 = vcmp.eq.f32.partialorder %v323, %v326
    %v328 = vsel %vm327, %v129, 8
    %v329 = vsel %vm267, %v328, 2147483647
    %v330 = vand.u32 %v329, 65535
    %v331 = vshra.s32 %v329, 16
    %v332 = vcvt.s32.f32 %v330
    %v333 = vcvt.s32.f32 %v331
    %334 = vmin.xlane.f32.xlu0 %v333
    %v335 = vpop.xlane.xlu0 %334
    %vm336 = vcmp.eq.f32.partialorder %v333, %v335
    %v337 = vsel %vm336, %v332, inf
    %338 = vmin.xlane.f32.xlu0 %v337
    %v339 = vpop.xlane.xlu0 %338
    %v340 = vcvt.f32.s32 %v339
    %v341 = vcvt.f32.s32 %v335
    %v342 = vshll.u32 %v341, 16
    %v343 = vadd.s32 %v342, %v340
    %vm344 = vcmp.eq.s32.totalorder %v129, %v343
    %vm345 = vmor %vm318, %vm344
    %347 = vrot.lane.b32.xlu0 %v251, 120
    %v348 = vpop.permute.xlu0 %347
    %v350 = vsel %vm345, %v348, -1e+09
    %v351 = vsel %vm267, %v350, -inf
    %352 = vmax.xlane.f32.xlu0 %v351
    %v353 = vpop.xlane.xlu0 %352
    %v354 = vsub.f32 %v350, %v353
    %v355 = vmul.f32 %v354, 1.442695
    %v356 = vpow.pop %v355
    %v357 = vsel %vm267, %v356, 0.0
    %358 = vadd.xlane.f32.xlu0 %v357
    %v359 = vpop.xlane.xlu0 %358
    %v360 = vrcp.pop %v359
    %v361 = vmul.f32 1.0, %v360
    %v362 = vmul.f32 %v356, %v361
    %363 = vst.msk [vmem:[#allocation5] sm:$0x3] %vm267, %v362
    // Predicated region
    $region18: #{tpu_custom_call.1} parent=1 // pred_check
      _
    $region19: #{tpu_custom_call.1} parent=1 // pred_check_branch
      %365 = sbr.rel (0) target = $region21
    $region20: #{tpu_custom_call.1} parent=1 // pred_region
      %s367 = ssub.s32 32, 32
      %368 = vsyncadd [#allocation4], %s367
      %s370 = sshll.u32 [#allocation5], 4
      %s371 = int_to_ptr.vmem [resolvable:$true] %s370
      %373 = dma.vmem_to_hbm [thread:$0]  %s371, 32, %s3, [#allocation4]
    $region21: #{tpu_custom_call.1} parent=1 // pred_fallthru
      _
    // Predicated region
    $region22: #{tpu_custom_call.1} parent=1 // pred_check
      _
    $region23: #{tpu_custom_call.1} parent=1 // pred_check_branch
      %375 = sbr.rel (0) target = $region25
    $region24: #{tpu_custom_call.1} parent=1 // pred_region
      %376 = dma.done [#allocation4], 32
    $region25: #{tpu_custom_call.1} parent=1 // pred_fallthru
      _
    %377 = vsyncpa [#allocation3], 1
    %378 = vsyncpa [#allocation4], 1

</llo_original>
